<compile_context>
chip_gen: v6e
topology: v6e:2x2x1
jax: 0.10.0
libtpu: 0.0.40
codegen_flags: <defaults>
</compile_context>

<pallas_src>
import functools

import jax
import jax.numpy as jnp
from jax.experimental import pallas as pl
from jax.experimental.pallas import tpu as pltpu


_W1_SINGLE_BUFFER_BYTES = 4 * 2**20   # above this, a fully-resident W1 is single-buffered


def _token_learner_kernel(x_ref, w1_ref, b1_ref, w2_ref, b2_ref, o_ref,
                          attn_ref, acc_ref, *, bt, nt, inv_n, approx_gelu):
    """One grid step: `bt` batch elements x `nt` spatial positions x one GDF tile.

    x_ref    : (bt*nt, C_pad)     bf16   stacked pixels of the current (batch, spatial) tile
    w1_ref   : (C_pad, gdf_tile)  bf16   current column slice of the dense conv1 weight
    b1_ref   : (1, gdf_tile)      f32
    w2_ref   : (gdf_tile, G)      bf16   current row slice of the block-diagonal conv2 weight
    b2_ref   : (1, G)             f32
    o_ref    : (bt, G, C_pad)            lane-dense output block (C on lanes)
    attn_ref : (bt*nt, G)         f32    attention logits, accumulated across GDF tiles
    acc_ref  : (bt, G, C_pad)     f32    output accumulator, resident across the n axis
    """
    ni = pl.program_id(1)
    gi = pl.program_id(2)

    @pl.when(jnp.logical_and(ni == 0, gi == 0))
    def _init_acc():
        acc_ref[...] = jnp.zeros_like(acc_ref)

    @pl.when(gi == 0)
    def _init_attn():
        attn_ref[...] = jnp.zeros_like(attn_ref)

    x = x_ref[...]                                            # (bt*nt, C_pad) bf16

    # conv1 (grouped 1x1 == one dense matmul), sliced over the current GDF tile:
    # bf16 MXU operands with f32 accumulation; bias add stays in f32 (v5e has no bf16 VPU).
    h = jnp.dot(x, w1_ref[...], preferred_element_type=jnp.float32) + b1_ref[...]
    # tanh GELU goes to the otherwise-idle EUP slot; the exact-erf polynomial is ~20 VPU ops per
    # element over the whole (rows, gdf_tile) tile and would bind the VALU before the MXU.
    # (Slight, intentional deviation from torch.nn.GELU's erf default; see `approximate_gelu`.)
    h = jax.nn.gelu(h, approximate=approx_gelu)

    # conv2 (grouped 1x1, one scalar per group) as a block-diagonal matmul; accumulate the skinny
    # (rows, G) logits across GDF tiles in a small VMEM scratch.
    # TODO(synk): for very small GDF (< ~1-2K) compute attn on the VPU instead
    # (h.reshape(rows, G, DF) * w2, reduce over DF) to avoid the MXU's 256-wide result padding.
    attn_ref[...] += jnp.dot(h.astype(jnp.bfloat16), w2_ref[...],
                             preferred_element_type=jnp.float32)

    @pl.when(gi == pl.num_programs(2) - 1)
    def _contract():
        # out[b, g, c] += sum_n attn[b, n, g] * x[b, n, c] -- one batched MXU contraction,
        # emitted lane-dense over C; the big x tile is never transposed.
        attn = (attn_ref[...] + b2_ref[...]).astype(jnp.bfloat16)
        acc_ref[...] += jnp.einsum("bng,bnc->bgc",
                                   attn.reshape(bt, nt, -1), x.reshape(bt, nt, -1),
                                   preferred_element_type=jnp.float32)

    @pl.when(jnp.logical_and(ni == pl.num_programs(1) - 1,
                             gi == pl.num_programs(2) - 1))
    def _finalize():
        o_ref[...] = (acc_ref[...] * inv_n).astype(o_ref.dtype)


def _round_up(n, m):
    return ((n + m - 1) // m) * m


def _largest_divisor_leq(n, cap):
    for d in range(min(n, cap), 0, -1):
        if n % d == 0:
            return d
    return 1


def _choose_gdf_tile(gdf, c_pad, g, budget):
    """Largest GDF tile (divisor of GDF; a multiple of 128 unless it is GDF itself) such that the
    W1 block(s) plus a >=128-row hidden tile (f32 + bf16 copy) and the small operands fit."""
    min_rows = 128
    cands = sorted({gdf} | {t for t in range(128, gdf, 128) if gdf % t == 0}, reverse=True)
    for t in cands:
        n_buf = 1 if (t == gdf and c_pad * t * 2 >= _W1_SINGLE_BUFFER_BYTES) else 2
        need = n_buf * c_pad * t * 2 + min_rows * t * 6 + 2 * (t * 4 + t * g * 2)
        if need <= budget:
            return t
    return cands[-1]


def token_learner_pallas(x_nchw, w1, b1, w2, b2, *, num_output_tokens, approximate_gelu=True):
    """x_nchw: (B, C, H, W).  Returns (B, C, num_output_tokens), matching the PyTorch module.

    `approximate_gelu=True` (default) uses the tanh GELU (EUP, fast); set False for exact-erf
    parity with torch.nn.GELU at some VPU cost.
    """
    B, C, H, W = x_nchw.shape
    N = H * W
    G = num_output_tokens
    GDF = w1.shape[0]                       # G * dim * ff_mult

    # ---- VMEM-capacity-aware tile selection -------------------------------------------------
    try:
        vmem_cap = int(pltpu.get_tpu_info().vmem_capacity_bytes)
    except Exception:                        # pragma: no cover - conservative (v7x) fallback
        vmem_cap = 64 * 2**20
    budget = int(vmem_cap * 0.8)             # headroom for Mosaic internal scratch

    C_pad = _round_up(C, 128)                # lane-dense channels (no masked vst / partial loads)

    gdf_tile = _choose_gdf_tile(GDF, C_pad, G, budget)
    n_gdf = GDF // gdf_tile
    w1_bufs = 1 if (n_gdf == 1 and C_pad * GDF * 2 >= _W1_SINGLE_BUFFER_BYTES) else 2

    # Rows (= matmul1 M dim) bounded by what the hidden tile + x blocks leave in the budget.
    fixed = (w1_bufs * C_pad * gdf_tile * 2                       # W1 block(s), bf16
             + 2 * (gdf_tile * 4 + gdf_tile * G * 2 + G * 4))     # b1 / w2 / b2 blocks
    per_row = (gdf_tile * 6                                       # hidden tile: f32 + bf16 copy
               + 2 * C_pad * 2                                    # x block, double-buffered bf16
               + G * 6)                                           # attn scratch + bf16 temp
    rows_cap = (budget - fixed) // per_row
    rows_cap = max(16, min(1024, (rows_cap // 16) * 16))

    # Spatial axis: zero-pad to a 16-multiple tile (zero rows contribute exactly 0 to the output).
    n16 = _round_up(N, 16)
    if n16 <= rows_cap:
        nt, n_tiles = n16, 1
    else:
        nt = rows_cap
        n_tiles = -(-N // nt)
    N_pad = nt * n_tiles

    if n_tiles == 1:
        bt_cap = max(1, rows_cap // nt)
        if B >= 2:
            bt_cap = min(bt_cap, B // 2)     # keep >=2 batch tiles: v7x splits the parallel axis over 2 TCs
        bt = _largest_divisor_leq(B, max(1, bt_cap))
    else:
        bt = 1
    rows = bt * nt
    grid = (B // bt, n_tiles, n_gdf)

    # ---- plain-JAX glue: layout conversion, padding, block-diag packing, bf16 casts ----------
    x_bnc = jnp.transpose(x_nchw, (0, 2, 3, 1)).reshape(B, N, C)
    if N_pad != N or C_pad != C:
        x_bnc = jnp.pad(x_bnc, ((0, 0), (0, N_pad - N), (0, C_pad - C)))
    x_flat = x_bnc.reshape(B * N_pad, C_pad).astype(jnp.bfloat16)

    w1_t = jnp.transpose(w1.reshape(GDF, C), (1, 0))              # (C, GDF)
    if C_pad != C:
        w1_t = jnp.pad(w1_t, ((0, C_pad - C), (0, 0)))
    w1_t = w1_t.astype(jnp.bfloat16)
    b1_r = b1.reshape(1, GDF).astype(jnp.float32)
    eye_g = jnp.eye(G, dtype=jnp.float32)
    w2_bd = (eye_g[:, None, :] * w2[:, :, None]).reshape(GDF, G).astype(jnp.bfloat16)
    b2_r = b2.reshape(1, G).astype(jnp.float32)

    # ---- VMEM accounting (clamped to physical capacity minus headroom) -----------------------
    out_bytes = x_nchw.dtype.itemsize
    est_bytes = (2 * rows * C_pad * 2                             # x blocks (double-buffered)
                 + w1_bufs * C_pad * gdf_tile * 2                 # W1 block(s)
                 + 2 * (gdf_tile * 4 + gdf_tile * G * 2 + G * 4)  # b1 / w2 / b2 blocks
                 + rows * gdf_tile * 6                            # h f32 + bf16 copy (GELU temps)
                 + rows * G * 6                                   # attn scratch + bf16 temp
                 + bt * G * C_pad * 4                             # f32 accumulator
                 + 2 * bt * G * C_pad * out_bytes)                # output blocks
    vmem_limit = int(min(max(32 * 2**20, 2 * est_bytes), int(vmem_cap * 0.9)))

    # W1: constant block index when fully resident -> fetched once per core, pipelined with step 0;
    # single-buffered (Buffered(1)) only when it is big enough for the 2x copy to matter.
    if w1_bufs == 1:
        w1_spec = pl.BlockSpec((C_pad, gdf_tile), lambda b, n, g: (0, g),
                               pipeline_mode=pl.Buffered(1))
    else:
        w1_spec = pl.BlockSpec((C_pad, gdf_tile), lambda b, n, g: (0, g))

    kernel = functools.partial(_token_learner_kernel, bt=bt, nt=nt, inv_n=1.0 / N,
                               approx_gelu=approximate_gelu)

    out_bgc = pl.pallas_call(
        kernel,
        out_shape=jax.ShapeDtypeStruct((B, G, C_pad), x_nchw.dtype),
        grid_spec=pltpu.PrefetchScalarGridSpec(
            num_scalar_prefetch=0,
            grid=grid,
            in_specs=[
                pl.BlockSpec((rows, C_pad), lambda b, n, g: (b * n_tiles + n, 0)),
                w1_spec,
                pl.BlockSpec((1, gdf_tile), lambda b, n, g: (0, g)),
                pl.BlockSpec((gdf_tile, G), lambda b, n, g: (g, 0)),
                pl.BlockSpec((1, G), lambda b, n, g: (0, 0)),
            ],
            out_specs=pl.BlockSpec((bt, G, C_pad), lambda b, n, g: (b, 0, 0)),
            scratch_shapes=[
                pltpu.VMEM((rows, G), jnp.float32),        # attn logits across GDF tiles
                pltpu.VMEM((bt, G, C_pad), jnp.float32),   # output accumulator across the n axis
            ],
        ),
        compiler_params=pltpu.CompilerParams(
            dimension_semantics=("parallel", "arbitrary", "arbitrary"),
            vmem_limit_bytes=vmem_limit,
        ),
    )(x_flat, w1_t, b1_r, w2_bd, b2_r)

    # Kernel emits lane-dense (B, G, C_pad); callers expect (B, C, G).  Drop the channel padding.
    return jnp.transpose(out_bgc, (0, 2, 1))[:, :C, :]


def token_learner_reference(x_nchw, w1, b1, w2, b2, *, num_output_tokens):
    """Pure-JAX f32 reference mirroring the PyTorch module exactly (exact-erf GELU)."""
    B, C, H, W = x_nchw.shape
    G = num_output_tokens
    GDF = w1.shape[0]
    x_bnc = jnp.transpose(x_nchw, (0, 2, 3, 1)).reshape(B, H * W, C)
    h = jax.nn.gelu(jnp.einsum("bnc,oc->bno", x_bnc, w1.reshape(GDF, C)) + b1,
                    approximate=False)
    h = h.reshape(B, H * W, G, GDF // G)
    attn = jnp.einsum("bngd,gd->bng", h, w2) + b2                    # (B, N, G)
    out = jnp.einsum("bnc,bng->bcg", x_bnc, attn) / (H * W)
    return out


if __name__ == "__main__":
    # Module hyperparameters (small shapes).
    dim = 16
    ff_mult = 2
    num_output_tokens = 8
    B, H, W = 2, 8, 8
    DF = dim * ff_mult
    inner_dim = DF * num_output_tokens

    key = jax.random.PRNGKey(0)
    kx, k1, k2, k3, k4 = jax.random.split(key, 5)

    x = jax.random.normal(kx, (B, dim, H, W), dtype=jnp.float32)      # NCHW, like PyTorch

    # Deterministic synthetic parameters (shapes from the module __init__).
    # Conv2d(dim*G, inner_dim, 1, groups=G): weight (inner_dim, dim, 1, 1), bias (inner_dim,)
    w1 = jax.random.normal(k1, (inner_dim, dim, 1, 1), dtype=jnp.float32) * 0.1
    b1 = jax.random.normal(k2, (inner_dim,), dtype=jnp.float32) * 0.1
    # Conv2d(inner_dim, G, 1, groups=G): weight (G, DF, 1, 1) stored squeezed as (G, DF); bias (G,)
    w2 = jax.random.normal(k3, (num_output_tokens, DF), dtype=jnp.float32) * 0.1
    b2 = jax.random.normal(k4, (num_output_tokens,), dtype=jnp.float32) * 0.1

    out = token_learner_pallas(x, w1, b1, w2, b2, num_output_tokens=num_output_tokens)
    out = jax.block_until_ready(out)

    ref = token_learner_reference(x, w1, b1, w2, b2, num_output_tokens=num_output_tokens)
    assert out.shape == (B, dim, num_output_tokens)
    # bf16 MXU operands (f32 accumulation) + tanh GELU vs. an all-f32 erf reference -> relaxed
    # tolerance; both deviations are intentional performance trade-offs.
    assert jnp.allclose(out, ref, atol=1e-2, rtol=5e-2), "mismatch vs reference"

    print("KERNEL_OK")
</pallas_src>

<mosaic_0001>
module attributes {stable_mosaic.version = 11 : i64} {
  func.func @_token_learner_kernel(%arg0: i32, %arg1: i32, %arg2: i32, %arg3: memref<64x128xbf16, #tpu.memory_space<vmem>>, %arg4: memref<128x256xbf16, #tpu.memory_space<vmem>>, %arg5: memref<1x256xf32, #tpu.memory_space<vmem>>, %arg6: memref<256x8xbf16, #tpu.memory_space<vmem>>, %arg7: memref<1x8xf32, #tpu.memory_space<vmem>>, %arg8: memref<1x8x128xf32, #tpu.memory_space<vmem>>, %arg9: memref<64x8xf32, #tpu.memory_space<vmem>>, %arg10: memref<1x8x128xf32, #tpu.memory_space<vmem>>) attributes {dimension_semantics = [#tpu.dimension_semantics<parallel>, #tpu.dimension_semantics<arbitrary>, #tpu.dimension_semantics<arbitrary>], iteration_bounds = array<i64: 2, 1, 1>, scalar_prefetch = 0 : i64, scratch_operands = 2 : i64, tpu.core_type = #tpu.core_type<tc>, window_params = [{transform_indices = @transform_0, window_bounds = array<i64: 64, 128>}, {transform_indices = @transform_1, window_bounds = array<i64: 128, 256>}, {transform_indices = @transform_2, window_bounds = array<i64: 1, 256>}, {transform_indices = @transform_3, window_bounds = array<i64: 256, 8>}, {pipeline_mode = #tpu.pipeline_mode<synchronous>, transform_indices = @transform_4, window_bounds = array<i64: 1, 8>}, {transform_indices = @transform_5, window_bounds = array<i64: 1, 8, 128>}]} {
    %c0_i32 = arith.constant 0 : i32
    %0 = arith.cmpi eq, %arg1, %c0_i32 : i32
    %c0_i32_0 = arith.constant 0 : i32
    %1 = arith.cmpi eq, %arg2, %c0_i32_0 : i32
    %2 = arith.andi %0, %1 : i1
    %3 = arith.extui %2 : i1 to i32
    %c0_i32_1 = arith.constant 0 : i32
    %4 = arith.cmpi ne, %3, %c0_i32_1 : i32
    scf.if %4 {
      %cst_25 = arith.constant 0.000000e+00 : f32
      %41 = vector.broadcast %cst_25 : f32 to vector<1x8x128xf32>
      %c0_26 = arith.constant 0 : index
      %c0_27 = arith.constant 0 : index
      %c0_28 = arith.constant 0 : index
      %42 = vector.load %arg10[%c0_26, %c0_27, %c0_28] : memref<1x8x128xf32, #tpu.memory_space<vmem>>, vector<1x8x128xf32>
      tpu.vector_store %arg10[%c0_26, %c0_27, %c0_28], %41 {strides = array<i32>} : memref<1x8x128xf32, #tpu.memory_space<vmem>>, vector<1x8x128xf32>,
    } else {
    }
    %c0_i32_2 = arith.constant 0 : i32
    %5 = arith.cmpi eq, %arg2, %c0_i32_2 : i32
    %6 = arith.extui %5 : i1 to i32
    %c0_i32_3 = arith.constant 0 : i32
    %7 = arith.cmpi ne, %6, %c0_i32_3 : i32
    scf.if %7 {
      %cst_25 = arith.constant 0.000000e+00 : f32
      %41 = vector.broadcast %cst_25 : f32 to vector<64x8xf32>
      %c0_26 = arith.constant 0 : index
      %c0_27 = arith.constant 0 : index
      %42 = vector.load %arg9[%c0_26, %c0_27] : memref<64x8xf32, #tpu.memory_space<vmem>>, vector<64x8xf32>
      tpu.vector_store %arg9[%c0_26, %c0_27], %41 {strides = array<i32>} : memref<64x8xf32, #tpu.memory_space<vmem>>, vector<64x8xf32>,
    } else {
    }
    %c0 = arith.constant 0 : index
    %c0_4 = arith.constant 0 : index
    %8 = vector.load %arg3[%c0, %c0_4] : memref<64x128xbf16, #tpu.memory_space<vmem>>, vector<64x128xbf16>
    %c0_5 = arith.constant 0 : index
    %c0_6 = arith.constant 0 : index
    %9 = vector.load %arg4[%c0_5, %c0_6] : memref<128x256xbf16, #tpu.memory_space<vmem>>, vector<128x256xbf16>
    %cst = arith.constant dense<0.000000e+00> : vector<64x256xf32>
    %10 = tpu.matmul %8, %9, %cst {dimension_numbers = #tpu.dot_dimension_numbers<[1], [0], [0], [1], [0, 0, 1, 1], [], []>} : vector<64x128xbf16>, vector<128x256xbf16>, vector<64x256xf32> -> vector<64x256xf32>
    %c0_7 = arith.constant 0 : index
    %c0_8 = arith.constant 0 : index
    %11 = vector.load %arg5[%c0_7, %c0_8] : memref<1x256xf32, #tpu.memory_space<vmem>>, vector<1x256xf32>
    %12 = vector.broadcast %11 : vector<1x256xf32> to vector<64x256xf32>
    %13 = arith.addf %10, %12 : vector<64x256xf32>
    %14 = arith.mulf %13, %13 : vector<64x256xf32>
    %15 = arith.mulf %13, %14 : vector<64x256xf32>
    %cst_9 = arith.constant 4.471500e-02 : f32
    %16 = vector.broadcast %cst_9 : f32 to vector<64x256xf32>
    %17 = arith.mulf %16, %15 : vector<64x256xf32>
    %18 = arith.addf %13, %17 : vector<64x256xf32>
    %cst_10 = arith.constant 0.797884583 : f32
    %19 = vector.broadcast %cst_10 : f32 to vector<64x256xf32>
    %20 = arith.mulf %19, %18 : vector<64x256xf32>
    %21 = math.tanh %20 : vector<64x256xf32>
    %cst_11 = arith.constant 1.000000e+00 : f32
    %22 = vector.broadcast %cst_11 : f32 to vector<64x256xf32>
    %23 = arith.addf %22, %21 : vector<64x256xf32>
    %cst_12 = arith.constant 5.000000e-01 : f32
    %24 = vector.broadcast %cst_12 : f32 to vector<64x256xf32>
    %25 = arith.mulf %24, %23 : vector<64x256xf32>
    %26 = arith.mulf %13, %25 : vector<64x256xf32>
    %c0_13 = arith.constant 0 : index
    %c0_14 = arith.constant 0 : index
    %27 = vector.load %arg9[%c0_13, %c0_14] : memref<64x8xf32, #tpu.memory_space<vmem>>, vector<64x8xf32>
    %28 = arith.truncf %26 : vector<64x256xf32> to vector<64x256xbf16>
    %c0_15 = arith.constant 0 : index
    %c0_16 = arith.constant 0 : index
    %29 = vector.load %arg6[%c0_15, %c0_16] : memref<256x8xbf16, #tpu.memory_space<vmem>>, vector<256x8xbf16>
    %cst_17 = arith.constant dense<0.000000e+00> : vector<64x8xf32>
    %30 = tpu.matmul %28, %29, %cst_17 {dimension_numbers = #tpu.dot_dimension_numbers<[1], [0], [0], [1], [0, 0, 1, 1], [], []>} : vector<64x256xbf16>, vector<256x8xbf16>, vector<64x8xf32> -> vector<64x8xf32>
    %31 = arith.addf %27, %30 : vector<64x8xf32>
    %c0_18 = arith.constant 0 : index
    %c0_19 = arith.constant 0 : index
    %32 = vector.load %arg9[%c0_18, %c0_19] : memref<64x8xf32, #tpu.memory_space<vmem>>, vector<64x8xf32>
    tpu.vector_store %arg9[%c0_18, %c0_19], %31 {strides = array<i32>} : memref<64x8xf32, #tpu.memory_space<vmem>>, vector<64x8xf32>,
    %c0_i32_20 = arith.constant 0 : i32
    %33 = arith.cmpi eq, %arg2, %c0_i32_20 : i32
    %34 = arith.extui %33 : i1 to i32
    %c0_i32_21 = arith.constant 0 : i32
    %35 = arith.cmpi ne, %34, %c0_i32_21 : i32
    scf.if %35 {
      %c0_25 = arith.constant 0 : index
      %c0_26 = arith.constant 0 : index
      %41 = vector.load %arg9[%c0_25, %c0_26] : memref<64x8xf32, #tpu.memory_space<vmem>>, vector<64x8xf32>
      %c0_27 = arith.constant 0 : index
      %c0_28 = arith.constant 0 : index
      %42 = vector.load %arg7[%c0_27, %c0_28] : memref<1x8xf32, #tpu.memory_space<vmem>>, vector<1x8xf32>
      %43 = vector.broadcast %42 : vector<1x8xf32> to vector<64x8xf32>
      %44 = arith.addf %41, %43 : vector<64x8xf32>
      %45 = arith.truncf %44 : vector<64x8xf32> to vector<64x8xbf16>
      %c0_29 = arith.constant 0 : index
      %c0_30 = arith.constant 0 : index
      %c0_31 = arith.constant 0 : index
      %46 = vector.load %arg10[%c0_29, %c0_30, %c0_31] : memref<1x8x128xf32, #tpu.memory_space<vmem>>, vector<1x8x128xf32>
      %47 = vector.shape_cast %45 : vector<64x8xbf16> to vector<1x64x8xbf16>
      %48 = vector.shape_cast %8 : vector<64x128xbf16> to vector<1x64x128xbf16>
      "tpu.trace_start"() <{level = 10 : i32, message = "bng,bnc->bgc"}> : () -> ()
      %cst_32 = arith.constant dense<0.000000e+00> : vector<1x8x128xf32>
      %49 = tpu.matmul %47, %48, %cst_32 {dimension_numbers = #tpu.dot_dimension_numbers<[1], [1], [2], [2], [0, 0, 0, 2, 1, 2], [0], [0]>} : vector<1x64x8xbf16>, vector<1x64x128xbf16>, vector<1x8x128xf32> -> vector<1x8x128xf32>
      "tpu.trace_stop"() : () -> ()
      %50 = arith.addf %46, %49 : vector<1x8x128xf32>
      %c0_33 = arith.constant 0 : index
      %c0_34 = arith.constant 0 : index
      %c0_35 = arith.constant 0 : index
      %51 = vector.load %arg10[%c0_33, %c0_34, %c0_35] : memref<1x8x128xf32, #tpu.memory_space<vmem>>, vector<1x8x128xf32>
      tpu.vector_store %arg10[%c0_33, %c0_34, %c0_35], %50 {strides = array<i32>} : memref<1x8x128xf32, #tpu.memory_space<vmem>>, vector<1x8x128xf32>,
    } else {
    }
    %c0_i32_22 = arith.constant 0 : i32
    %36 = arith.cmpi eq, %arg1, %c0_i32_22 : i32
    %c0_i32_23 = arith.constant 0 : i32
    %37 = arith.cmpi eq, %arg2, %c0_i32_23 : i32
    %38 = arith.andi %36, %37 : i1
    %39 = arith.extui %38 : i1 to i32
    %c0_i32_24 = arith.constant 0 : i32
    %40 = arith.cmpi ne, %39, %c0_i32_24 : i32
    scf.if %40 {
      %c0_25 = arith.constant 0 : index
      %c0_26 = arith.constant 0 : index
      %c0_27 = arith.constant 0 : index
      %41 = vector.load %arg10[%c0_25, %c0_26, %c0_27] : memref<1x8x128xf32, #tpu.memory_space<vmem>>, vector<1x8x128xf32>
      %cst_28 = arith.constant 1.562500e-02 : f32
      %42 = vector.broadcast %cst_28 : f32 to vector<1x8x128xf32>
      %43 = arith.mulf %41, %42 : vector<1x8x128xf32>
      %c0_29 = arith.constant 0 : index
      %c0_30 = arith.constant 0 : index
      %c0_31 = arith.constant 0 : index
      %44 = vector.load %arg8[%c0_29, %c0_30, %c0_31] : memref<1x8x128xf32, #tpu.memory_space<vmem>>, vector<1x8x128xf32>
      tpu.vector_store %arg8[%c0_29, %c0_30, %c0_31], %43 {strides = array<i32>} : memref<1x8x128xf32, #tpu.memory_space<vmem>>, vector<1x8x128xf32>,
    } else {
    }
    return
  }
  func.func @transform_0(%arg0: i32, %arg1: i32, %arg2: i32) -> (i32, i32) {
    %c1_i32 = arith.constant 1 : i32
    %0 = arith.muli %arg0, %c1_i32 : i32
    %1 = arith.addi %0, %arg1 : i32
    %c0_i32 = arith.constant 0 : i32
    %c0_i32_0 = arith.constant 0 : i32
    return %1, %c0_i32 : i32, i32
  }
  func.func @transform_1(%arg0: i32, %arg1: i32, %arg2: i32) -> (i32, i32) {
    %c0_i32 = arith.constant 0 : i32
    %c0_i32_0 = arith.constant 0 : i32
    return %c0_i32, %arg2 : i32, i32
  }
  func.func @transform_2(%arg0: i32, %arg1: i32, %arg2: i32) -> (i32, i32) {
    %c0_i32 = arith.constant 0 : i32
    %c0_i32_0 = arith.constant 0 : i32
    return %c0_i32, %arg2 : i32, i32
  }
  func.func @transform_3(%arg0: i32, %arg1: i32, %arg2: i32) -> (i32, i32) {
    %c0_i32 = arith.constant 0 : i32
    %c0_i32_0 = arith.constant 0 : i32
    return %arg2, %c0_i32 : i32, i32
  }
  func.func @transform_4(%arg0: i32, %arg1: i32, %arg2: i32) -> (i32, i32) {
    %c0_i32 = arith.constant 0 : i32
    %c0_i32_0 = arith.constant 0 : i32
    %c0_i32_1 = arith.constant 0 : i32
    return %c0_i32, %c0_i32_0 : i32, i32
  }
  func.func @transform_5(%arg0: i32, %arg1: i32, %arg2: i32) -> (i32, i32, i32) {
    %c0_i32 = arith.constant 0 : i32
    %c0_i32_0 = arith.constant 0 : i32
    %c0_i32_1 = arith.constant 0 : i32
    return %arg0, %c0_i32, %c0_i32_0 : i32, i32, i32
  }
}

</mosaic_0001>

<llo_original>
// kernel: tpu_custom_call.1
$region0: #{tpu_custom_call.1}
  #allocation0 [shape = 'u32[]', space=smem, size = 0x4, offset = 0x4, fixed_abs, tag = 'smem constant byte address 0x4 - core index']
  #allocation1 [shape = 'u32[144,128]{1,0:T(1,128)}', space=vmem, size = 0x12000, scoped, tag = 'internal scratch']
  #allocation2 [shape = 'f32[64,8]{1,0:T(8,128)}', space=vmem, size = 0x8000, scoped, tag = 'scratch operand']
  #allocation3 [shape = 'f32[1,8,128]{2,1,0:T(8,128)}', space=vmem, size = 0x1000, scoped, tag = 'scratch operand']
  %s0 = inlined_call_operand.hbm [shape: bf16[128,128], index: 0, kind: input, shape index: {}]
  %s1 = inlined_call_operand.vmem [shape: bf16[128,256], index: 1, kind: input, shape index: {}]
  %s2 = inlined_call_operand.vmem [shape: f32[1,256], index: 2, kind: input, shape index: {}]
  %s3 = inlined_call_operand.vmem [shape: bf16[256,8], index: 3, kind: input, shape index: {}]
  %s4 = inlined_call_operand.vmem [shape: f32[1,8], index: 4, kind: input, shape index: {}]
  %s5 = inlined_call_operand.hbm [shape: f32[2,8,128], index: 5, kind: output, shape index: {}]
  %s6 = sld [smem:[#allocation0]]
  $region73: #{tpu_custom_call.1} parent=0
    _
  %s8 = ssub.s32 1, %s6
  %s9 = scalar_select 0, %s8, %s6
  $region1: #{tpu_custom_call.1} parent=0
    #allocation4 [shape = 'u8[32768]{0}', space=vmem, size = 0x8000, scoped, tag = 'input window, operand 0']
    #allocation5 [shape = 's32[2]{0}', space=sflag, size = 0x8, scoped, tag = 'scoped memory for tpu_custom_call.1']
    #allocation6 [shape = 's32[2]{0}', space=sflag, size = 0x8, scoped, tag = 'scoped memory for tpu_custom_call.1']
    #allocation7 [shape = 'u8[8192]{0}', space=vmem, size = 0x2000, scoped, tag = 'output window, operand 0']
    %10 = vsyncpa [#allocation5], 0
    %s11 = scalar_lea.sflag [#allocation5], 1
    %12 = vsyncpa %s11, 0
    %13 = vsyncpa [#allocation6], 0
    %s14 = scalar_lea.sflag [#allocation6], 1
    %15 = vsyncpa %s14, 0
    loop: start=0, step=1, limit=4
    $region2: #{tpu_custom_call.1} parent=1 // loop_pre_header
      _
    $region3: #{tpu_custom_call.1} parent=1 // loop_header
      %s17 = sphi 0, %s21
      %p18 = scmp.ge.s32.totalorder %s17, 4
      %s24 = sphi 0, %s43
      %s25 = sphi 0, %s39
      %s26 = sphi 0, %s35
      %s27 = sphi 0, %s24
      %s28 = sphi 0, %s25
      %s29 = sphi 0, %s26
      %s30 = sphi 0, %s27
      %s31 = sphi 0, %s28
      %s32 = sphi 0, %s29
      %s48 = sphi 0, %s50
      %s51 = sphi 0, %s48
      %s52 = sphi 0, %s51
      %s68 = sphi 0, %s52
      %s74 = sphi 0, %s76
      %s77 = sphi 0, %s74
      %s78 = sphi 0, %s77
      %s94 = sphi 0, %s78
      %s100 = sphi 0, %s102
      %s103 = sphi 0, %s100
      %s104 = sphi 0, %s103
      %s120 = sphi 0, %s104
      %s126 = sphi 0, %s128
      %s129 = sphi 0, %s126
      %s130 = sphi 0, %s129
      %s146 = sphi 0, %s130
      %s150 = sphi 0, %s150
      %s152 = sphi 0, %s150
      %s153 = sphi 0, %s152
      %s167 = sphi 0, %s153
      %s173 = sphi 0, %s175
      %s176 = sphi 0, %s173
      %s177 = sphi 0, %s176
      %s193 = sphi 0, %s177
    $region4: #{tpu_custom_call.1} parent=1 // loop_header_branch
      %20 = sbr.rel (%p18) target = $region8
    $region5: #{tpu_custom_call.1} parent=1 // loop_body
      %s22 = ssub.s32 %s17, 1
      %s23 = ssub.s32 %s17, 2
      %s33 = sadd.s32 1, %s26
      %p34 = scmp.ge.s32.totalorder %s33, 1
      %s35 = scalar_select %p34, 0, %s33
      %s36 = sadd.s32 1, %s25
      %s37 = scalar_select %p34, %s36, %s25
      %p38 = scmp.ge.s32.totalorder %s37, 1
      %s39 = scalar_select %p38, 0, %s37
      %s40 = sadd.s32 1, %s24
      %s41 = scalar_select %p38, %s40, %s24
      %p42 = scmp.ge.s32.totalorder %s41, 2
      %s43 = scalar_select %p42, 0, %s41
      %s44 = sadd.s32 %s24, %s25
      %s45 = sadd.s32 %s43, %s39
      %s46 = ssub.s32 %s44, %s45
      %p47 = scmp.eq.s32.totalorder %s46, 0
      %s49 = sadd.s32 %s48, 1
      %s50 = scalar_select %p47, %s48, %s49
      %p53 = pneg %p47
      %p54 = scmp.eq.s32.totalorder %s17, 1
      %p55 = por %p53, %p54
      %p56 = scmp.ne.s32.totalorder %s48, %s51
      %p57 = scmp.eq.s32.totalorder %s17, 0
      %p58 = por %p56, %p57
      %p59 = scmp.ne.s32.totalorder %s48, %s51
      %p60 = scmp.eq.s32.totalorder %s22, 1
      %p61 = por %p59, %p60
      %p62 = scmp.ne.s32.totalorder %s51, %s52
      %p63 = scmp.eq.s32.totalorder %s22, 0
      %p64 = por %p62, %p63
      %p65 = scmp.ne.s32.totalorder %s51, %s52
      %p66 = scmp.eq.s32.totalorder %s23, 1
      %p67 = por %p65, %p66
      %p69 = scmp.ne.s32.totalorder %s52, %s68
      %p70 = scmp.eq.s32.totalorder %s23, 0
      %p71 = por %p69, %p70
      %s72 = ssub.s32 %s26, %s35
      %p73 = scmp.eq.s32.totalorder %s72, 0
      %s75 = sadd.s32 %s74, 1
      %s76 = scalar_select %p73, %s74, %s75
      %p79 = pneg %p73
      %p80 = scmp.eq.s32.totalorder %s17, 1
      %p81 = por %p79, %p80
      %p82 = scmp.ne.s32.totalorder %s74, %s77
      %p83 = scmp.eq.s32.totalorder %s17, 0
      %p84 = por %p82, %p83
      %p85 = scmp.ne.s32.totalorder %s74, %s77
      %p86 = scmp.eq.s32.totalorder %s22, 1
      %p87 = por %p85, %p86
      %p88 = scmp.ne.s32.totalorder %s77, %s78
      %p89 = scmp.eq.s32.totalorder %s22, 0
      %p90 = por %p88, %p89
      %p91 = scmp.ne.s32.totalorder %s77, %s78
      %p92 = scmp.eq.s32.totalorder %s23, 1
      %p93 = por %p91, %p92
      %p95 = scmp.ne.s32.totalorder %s78, %s94
      %p96 = scmp.eq.s32.totalorder %s23, 0
      %p97 = por %p95, %p96
      %s98 = ssub.s32 %s26, %s35
      %p99 = scmp.eq.s32.totalorder %s98, 0
      %s101 = sadd.s32 %s100, 1
      %s102 = scalar_select %p99, %s100, %s101
      %p105 = pneg %p99
      %p106 = scmp.eq.s32.totalorder %s17, 1
      %p107 = por %p105, %p106
      %p108 = scmp.ne.s32.totalorder %s100, %s103
      %p109 = scmp.eq.s32.totalorder %s17, 0
      %p110 = por %p108, %p109
      %p111 = scmp.ne.s32.totalorder %s100, %s103
      %p112 = scmp.eq.s32.totalorder %s22, 1
      %p113 = por %p111, %p112
      %p114 = scmp.ne.s32.totalorder %s103, %s104
      %p115 = scmp.eq.s32.totalorder %s22, 0
      %p116 = por %p114, %p115
      %p117 = scmp.ne.s32.totalorder %s103, %s104
      %p118 = scmp.eq.s32.totalorder %s23, 1
      %p119 = por %p117, %p118
      %p121 = scmp.ne.s32.totalorder %s104, %s120
      %p122 = scmp.eq.s32.totalorder %s23, 0
      %p123 = por %p121, %p122
      %s124 = ssub.s32 %s26, %s35
      %p125 = scmp.eq.s32.totalorder %s124, 0
      %s127 = sadd.s32 %s126, 1
      %s128 = scalar_select %p125, %s126, %s127
      %p131 = pneg %p125
      %p132 = scmp.eq.s32.totalorder %s17, 1
      %p133 = por %p131, %p132
      %p134 = scmp.ne.s32.totalorder %s126, %s129
      %p135 = scmp.eq.s32.totalorder %s17, 0
      %p136 = por %p134, %p135
      %p137 = scmp.ne.s32.totalorder %s126, %s129
      %p138 = scmp.eq.s32.totalorder %s22, 1
      %p139 = por %p137, %p138
      %p140 = scmp.ne.s32.totalorder %s129, %s130
      %p141 = scmp.eq.s32.totalorder %s22, 0
      %p142 = por %p140, %p141
      %p143 = scmp.ne.s32.totalorder %s129, %s130
      %p144 = scmp.eq.s32.totalorder %s23, 1
      %p145 = por %p143, %p144
      %p147 = scmp.ne.s32.totalorder %s130, %s146
      %p148 = scmp.eq.s32.totalorder %s23, 0
      %p149 = por %p147, %p148
      %s151 = sadd.s32 %s150, 1
      %p154 = scmp.eq.s32.totalorder %s17, 1
      %p155 = scmp.ne.s32.totalorder %s150, %s152
      %p156 = scmp.eq.s32.totalorder %s17, 0
      %p157 = por %p155, %p156
      %p158 = scmp.ne.s32.totalorder %s150, %s152
      %p159 = scmp.eq.s32.totalorder %s22, 1
      %p160 = por %p158, %p159
      %p161 = scmp.ne.s32.totalorder %s152, %s153
      %p162 = scmp.eq.s32.totalorder %s22, 0
      %p163 = por %p161, %p162
      %p164 = scmp.ne.s32.totalorder %s152, %s153
      %p165 = scmp.eq.s32.totalorder %s23, 1
      %p166 = por %p164, %p165
      %p168 = scmp.ne.s32.totalorder %s153, %s167
      %p169 = scmp.eq.s32.totalorder %s23, 0
      %p170 = por %p168, %p169
      %s171 = ssub.s32 %s24, %s43
      %p172 = scmp.eq.s32.totalorder %s171, 0
      %s174 = sadd.s32 %s173, 1
      %s175 = scalar_select %p172, %s173, %s174
      %p178 = pneg %p172
      %p179 = scmp.eq.s32.totalorder %s17, 1
      %p180 = por %p178, %p179
      %p181 = scmp.ne.s32.totalorder %s173, %s176
      %p182 = scmp.eq.s32.totalorder %s17, 0
      %p183 = por %p181, %p182
      %p184 = scmp.ne.s32.totalorder %s173, %s176
      %p185 = scmp.eq.s32.totalorder %s22, 1
      %p186 = por %p184, %p185
      %p187 = scmp.ne.s32.totalorder %s176, %s177
      %p188 = scmp.eq.s32.totalorder %s22, 0
      %p189 = por %p187, %p188
      %p190 = scmp.ne.s32.totalorder %s176, %s177
      %p191 = scmp.eq.s32.totalorder %s23, 1
      %p192 = por %p190, %p191
      %p194 = scmp.ne.s32.totalorder %s177, %s193
      %p195 = scmp.eq.s32.totalorder %s23, 0
      %p196 = por %p194, %p195
      %p197 = scmp.le.s32.totalorder 1, %s17
      %p198 = scmp.lt.s32.totalorder %s17, 3
      %p199 = pnand %p197, %p198
      %p200 = pneg %p199
      // Predicated region
      $region9: #{tpu_custom_call.1} parent=5 // pred_check
        _
      $region10: #{tpu_custom_call.1} parent=5 // pred_check_branch
        %202 = sbr.rel (%p199) target = $region12
      $region11: #{tpu_custom_call.1} parent=5 // pred_region
        %s203 = ssub.s32 %s17, 1
        // Predicated region
        $region13: #{tpu_custom_call.1} parent=11 // pred_check
          %p204 = pneg %p90
        $region14: #{tpu_custom_call.1} parent=11 // pred_check_branch
          %206 = sbr.rel (%p204) target = $region16
        $region15: #{tpu_custom_call.1} parent=11 // pred_region
          %s207 = smul.u32 2, %s29
          %p208 = scmp.lt.s32.totalorder %s207, 1
          %s209 = scalar_select %p208, %s207, 1
          %s210 = smul.addr %s209, 4
          %s211 = scalar_lea.vmem %s1, %s210
          %s212 = smul.u32 2, %s29
        $region16: #{tpu_custom_call.1} parent=11 // pred_fallthru
          _
        // Predicated region
        $region17: #{tpu_custom_call.1} parent=11 // pred_check
          %p213 = pneg %p116
        $region18: #{tpu_custom_call.1} parent=11 // pred_check_branch
          %215 = sbr.rel (%p213) target = $region20
        $region19: #{tpu_custom_call.1} parent=11 // pred_region
          %s216 = smul.u32 2, %s29
          %p217 = scmp.lt.s32.totalorder %s216, 1
          %s218 = scalar_select %p217, %s216, 1
          %s219 = scalar_lea.vmem %s2, %s218
          %s220 = smul.u32 2, %s29
        $region20: #{tpu_custom_call.1} parent=11 // pred_fallthru
          _
        // Predicated region
        $region21: #{tpu_custom_call.1} parent=11 // pred_check
          %p221 = pneg %p142
        $region22: #{tpu_custom_call.1} parent=11 // pred_check_branch
          %223 = sbr.rel (%p221) target = $region24
        $region23: #{tpu_custom_call.1} parent=11 // pred_region
          %s224 = smul.u32 32, %s29
          %p225 = scmp.lt.s32.totalorder %s224, 31
          %s226 = scalar_select %p225, %s224, 31
          %s227 = smul.addr %s226, 4
          %s228 = scalar_lea.vmem %s3, %s227
          %s229 = smul.u32 32, %s29
        $region24: #{tpu_custom_call.1} parent=11 // pred_fallthru
          _
        // Predicated region
        $region25: #{tpu_custom_call.1} parent=11 // pred_check
          %p230 = pneg %p163
        $region26: #{tpu_custom_call.1} parent=11 // pred_check_branch
          %232 = sbr.rel (%p230) target = $region28
        $region27: #{tpu_custom_call.1} parent=11 // pred_region
          _
        $region28: #{tpu_custom_call.1} parent=11 // pred_fallthru
          _
      $region12: #{tpu_custom_call.1} parent=5 // pred_fallthru
        _
      %p233 = scmp.lt.s32.totalorder %s17, 2
      // Predicated region
      $region29: #{tpu_custom_call.1} parent=5 // pred_check
        %p234 = pneg %p233
      $region30: #{tpu_custom_call.1} parent=5 // pred_check_branch
        %236 = sbr.rel (%p234) target = $region32
      $region31: #{tpu_custom_call.1} parent=5 // pred_region
        // Predicated region
        $region33: #{tpu_custom_call.1} parent=31 // pred_check
          %p237 = pneg %p58
        $region34: #{tpu_custom_call.1} parent=31 // pred_check_branch
          %239 = sbr.rel (%p237) target = $region36
        $region35: #{tpu_custom_call.1} parent=31 // pred_region
          %s240 = sand.u32 %s48, 1
          %s241 = scalar_lea.sflag [#allocation5], %s240
          %s242 = sand.u32 %s48, 1
          %s243 = smul.addr %s242, 32
          %s244 = scalar_lea.vmem [#allocation4], %s243
          %s245 = sadd.s32 %s24, %s25
          %s246 = smul.u32 8, %s245
          %s248 = ssub.s32 512, 512
          %249 = vsyncadd %s241, %s248
          %s250 = smul.addr %s246, 64
          %s251 = scalar_lea.hbm %s0, %s250
          %s252 = sshll.u32 %s244, 4
          %s253 = int_to_ptr.vmem [resolvable:$true] %s252
          %258 = dma.hbm_to_vmem [thread:$0]  %s251, 512, %s253, %s241, 64, 64, 4
        $region36: #{tpu_custom_call.1} parent=31 // pred_fallthru
          _
      $region32: #{tpu_custom_call.1} parent=5 // pred_fallthru
        _
      %p259 = scmp.le.s32.totalorder 1, %s17
      %p260 = scmp.lt.s32.totalorder %s17, 3
      %p261 = pnand %p259, %p260
      %p262 = pneg %p261
      // Predicated region
      $region37: #{tpu_custom_call.1} parent=5 // pred_check
        _
      $region38: #{tpu_custom_call.1} parent=5 // pred_check_branch
        %264 = sbr.rel (%p261) target = $region40
      $region39: #{tpu_custom_call.1} parent=5 // pred_region
        %s265 = ssub.s32 %s17, 1
        %s266 = sand.u32 %s51, 1
        %s267 = scalar_lea.sflag [#allocation5], %s266
        %s268 = sand.u32 %s51, 1
        %s269 = smul.addr %s268, 32
        %s270 = scalar_lea.vmem [#allocation4], %s269
        // Predicated region
        $region41: #{tpu_custom_call.1} parent=39 // pred_check
          %p271 = pneg %p64
        $region42: #{tpu_custom_call.1} parent=39 // pred_check_branch
          %273 = sbr.rel (%p271) target = $region44
        $region43: #{tpu_custom_call.1} parent=39 // pred_region
          %274 = dma.done %s267, 512
        $region44: #{tpu_custom_call.1} parent=39 // pred_fallthru
          _
        %s275 = sand.u32 %s51, 1
        %s276 = scalar_lea.sflag [#allocation5], %s275
        %s277 = sand.u32 %s51, 1
        %s278 = smul.addr %s277, 32
        %s279 = scalar_lea.vmem [#allocation4], %s278
        %p280 = pneg %p64
        %p281 = pneg %p61
        %s282 = smul.u32 2, %s29
        %p283 = scmp.lt.s32.totalorder %s282, 1
        %s284 = scalar_select %p283, %s282, 1
        %s285 = smul.addr %s284, 4
        %s286 = scalar_lea.vmem %s1, %s285
        %p287 = pneg %p90
        %p288 = pneg %p87
        %s289 = smul.u32 2, %s29
        %p290 = scmp.lt.s32.totalorder %s289, 1
        %s291 = scalar_select %p290, %s289, 1
        %s292 = scalar_lea.vmem %s2, %s291
        %p293 = pneg %p116
        %p294 = pneg %p113
        %s295 = smul.u32 32, %s29
        %p296 = scmp.lt.s32.totalorder %s295, 31
        %s297 = scalar_select %p296, %s295, 31
        %s298 = smul.addr %s297, 4
        %s299 = scalar_lea.vmem %s3, %s298
        %p300 = pneg %p142
        %p301 = pneg %p139
        %p302 = pneg %p163
        %p303 = pneg %p160
        %p304 = pneg %p189
        %p305 = pneg %p186
        %s306 = sand.u32 %s176, 1
        %s307 = scalar_lea.sflag [#allocation6], %s306
        %s308 = sand.u32 %s176, 1
        %s309 = smul.addr %s308, 8
        %s310 = scalar_lea.vmem [#allocation7], %s309
        %s311 = sadd.s32 %s27, %s28
        %s312 = smul.u32 8, %s311
        %s313 = smul.u32 2, %s29
        %p314 = scmp.lt.s32.totalorder %s313, 1
        %s315 = scalar_select %p314, %s313, 1
        %s316 = smul.addr %s315, 4
        %s317 = scalar_lea.vmem %s1, %s316
        %s318 = smul.u32 2, %s29
        %s319 = smul.u32 2, %s29
        %p320 = scmp.lt.s32.totalorder %s319, 1
        %s321 = scalar_select %p320, %s319, 1
        %s322 = scalar_lea.vmem %s2, %s321
        %s323 = smul.u32 2, %s29
        %s324 = smul.u32 32, %s29
        %p325 = scmp.lt.s32.totalorder %s324, 31
        %s326 = scalar_select %p325, %s324, 31
        %s327 = smul.addr %s326, 4
        %s328 = scalar_lea.vmem %s3, %s327
        %s329 = smul.u32 32, %s29
        %p331 = scmp.eq.s32.totalorder %s28, 0
        %p332 = scmp.eq.s32.totalorder %s29, 0
        %p333 = pnand %p331, %p332
        %p334 = pneg %p333
        // Predicated region
        $region45: #{tpu_custom_call.1} parent=39 // pred_check
          _
        $region46: #{tpu_custom_call.1} parent=39 // pred_check_branch
          %336 = sbr.rel (%p333) target = $region48
        $region47: #{tpu_custom_call.1} parent=39 // pred_region
          %337 = vst [vmem:[#allocation3] sm:$0xff] 0.0
        $region48: #{tpu_custom_call.1} parent=39 // pred_fallthru
          _
        // Predicated region
        $region49: #{tpu_custom_call.1} parent=39 // pred_check
          %p338 = pneg %p332
        $region50: #{tpu_custom_call.1} parent=39 // pred_check_branch
          %340 = sbr.rel (%p338) target = $region52
        $region51: #{tpu_custom_call.1} parent=39 // pred_region
          %vm341 = vcmask 64512
          %342 = vst.msk [vmem:[#allocation2] sm:$0xff] %vm341, 0.0
          %343 = vst.msk [vmem:[#allocation2 + $0x8] sm:$0xff] %vm341, 0.0
          %344 = vst.msk [vmem:[#allocation2 + $0x10] sm:$0xff] %vm341, 0.0
          %345 = vst.msk [vmem:[#allocation2 + $0x18] sm:$0xff] %vm341, 0.0
          %346 = vst.msk [vmem:[#allocation2 + $0x20] sm:$0xff] %vm341, 0.0
          %347 = vst.msk [vmem:[#allocation2 + $0x28] sm:$0xff] %vm341, 0.0
          %348 = vst.msk [vmem:[#allocation2 + $0x30] sm:$0xff] %vm341, 0.0
          %349 = vst.msk [vmem:[#allocation2 + $0x38] sm:$0xff] %vm341, 0.0
        $region52: #{tpu_custom_call.1} parent=39 // pred_fallthru
          _
        %v350 = vld [vmem:[%s270] sm:$0xf]
        %v351 = vld [vmem:[%s270 + $0x4] sm:$0xf]
        %v352 = vld [vmem:[%s270 + $0x8] sm:$0xf]
        %v353 = vld [vmem:[%s270 + $0xc] sm:$0xf]
        %v354 = vld [vmem:[%s270 + $0x10] sm:$0xf]
        %v355 = vld [vmem:[%s270 + $0x14] sm:$0xf]
        %v356 = vld [vmem:[%s270 + $0x18] sm:$0xf]
        %v357 = vld [vmem:[%s270 + $0x1c] sm:$0xf]
        %v358 = vld [vmem:[%s317] sm:$0xff]
        %v359 = vld [vmem:[%s317 + $0x8] sm:$0xff]
        %v360 = vld [vmem:[%s317 + $0x10] sm:$0xff]
        %v361 = vld [vmem:[%s317 + $0x18] sm:$0xff]
        %v362 = vld [vmem:[%s317 + $0x20] sm:$0xff]
        %v363 = vld [vmem:[%s317 + $0x28] sm:$0xff]
        %v364 = vld [vmem:[%s317 + $0x30] sm:$0xff]
        %v365 = vld [vmem:[%s317 + $0x38] sm:$0xff]
        %v366 = vld [vmem:[%s317 + $0x40] sm:$0xff]
        %v367 = vld [vmem:[%s317 + $0x48] sm:$0xff]
        %v368 = vld [vmem:[%s317 + $0x50] sm:$0xff]
        %v369 = vld [vmem:[%s317 + $0x58] sm:$0xff]
        %v370 = vld [vmem:[%s317 + $0x60] sm:$0xff]
        %v371 = vld [vmem:[%s317 + $0x68] sm:$0xff]
        %v372 = vld [vmem:[%s317 + $0x70] sm:$0xff]
        %v373 = vld [vmem:[%s317 + $0x78] sm:$0xff]
        %v374 = vld [vmem:[%s322] sm:$0x3]
        %v376 = vlaneseq
        %v377 = vshrl.u32 %v376, 7
        %v378 = vsub.s32 0, %v377
        %v379 = vrot.slane %v374, %v378
        %v380 = vlaneseq
        %v381 = vshrl.u32 %v380, 7
        %v382 = vsub.s32 1, %v381
        %v383 = vrot.slane %v374, %v382
        %v394 = vunpack.c.l.b16 %v350
        %v395 = vunpack.c.l.b16 %v351
        %v396 = vunpack.c.l.b16 %v352
        %v397 = vunpack.c.l.b16 %v353
        %v398 = vunpack.c.l.b16 %v354
        %v399 = vunpack.c.l.b16 %v355
        %v400 = vunpack.c.l.b16 %v356
        %v401 = vunpack.c.l.b16 %v357
        %v402 = vpack.c.b16 %v395, %v394
        %v403 = vpack.c.b16 %v397, %v396
        %v404 = vpack.c.b16 %v399, %v398
        %v405 = vpack.c.b16 %v401, %v400
        %v426 = vunpack.c.l.b16 %v358
        %v427 = vunpack.c.h.b16 %v358
        %v428 = vunpack.c.l.b16 %v359
        %v429 = vunpack.c.h.b16 %v359
        %v430 = vunpack.c.l.b16 %v360
        %v431 = vunpack.c.h.b16 %v360
        %v432 = vunpack.c.l.b16 %v361
        %v433 = vunpack.c.h.b16 %v361
        %v434 = vunpack.c.l.b16 %v362
        %v435 = vunpack.c.h.b16 %v362
        %v436 = vunpack.c.l.b16 %v363
        %v437 = vunpack.c.h.b16 %v363
        %v438 = vunpack.c.l.b16 %v364
        %v439 = vunpack.c.h.b16 %v364
        %v440 = vunpack.c.l.b16 %v365
        %v441 = vunpack.c.h.b16 %v365
        %v442 = vunpack.c.l.b16 %v366
        %v443 = vunpack.c.h.b16 %v366
        %v444 = vunpack.c.l.b16 %v367
        %v445 = vunpack.c.h.b16 %v367
        %v446 = vunpack.c.l.b16 %v368
        %v447 = vunpack.c.h.b16 %v368
        %v448 = vunpack.c.l.b16 %v369
        %v449 = vunpack.c.h.b16 %v369
        %v450 = vunpack.c.l.b16 %v370
        %v451 = vunpack.c.h.b16 %v370
        %v452 = vunpack.c.l.b16 %v371
        %v453 = vunpack.c.h.b16 %v371
        %v454 = vunpack.c.l.b16 %v372
        %v455 = vunpack.c.h.b16 %v372
        %v456 = vunpack.c.l.b16 %v373
        %v457 = vunpack.c.h.b16 %v373
        %v458 = vpack.c.b16 %v428, %v426
        %v459 = vpack.c.b16 %v429, %v427
        %v460 = vpack.c.b16 %v432, %v430
        %v461 = vpack.c.b16 %v433, %v431
        %v462 = vpack.c.b16 %v436, %v434
        %v463 = vpack.c.b16 %v437, %v435
        %v464 = vpack.c.b16 %v440, %v438
        %v465 = vpack.c.b16 %v441, %v439
        %v466 = vpack.c.b16 %v444, %v442
        %v467 = vpack.c.b16 %v445, %v443
        %v468 = vpack.c.b16 %v448, %v446
        %v469 = vpack.c.b16 %v449, %v447
        %v470 = vpack.c.b16 %v452, %v450
        %v471 = vpack.c.b16 %v453, %v451
        %v472 = vpack.c.b16 %v456, %v454
        %v473 = vpack.c.b16 %v457, %v455
        %490 = vmatprep.subr.bf16.mxu0 %v473
        %491 = vmatpush1.bf16.msra.mxu0 %v472
        %492 = vmatprep.subr.bf16.mxu0 %v471
        %493 = vmatpush1.bf16.msra.mxu0 %v470
        %494 = vmatprep.subr.bf16.mxu0 %v469
        %495 = vmatpush1.bf16.msra.mxu0 %v468
        %496 = vmatprep.subr.bf16.mxu0 %v467
        %497 = vmatpush1.bf16.msra.mxu0 %v466
        %498 = vmatprep.subr.bf16.mxu0 %v465
        %499 = vmatpush1.bf16.msra.mxu0 %v464
        %500 = vmatprep.subr.bf16.mxu0 %v463
        %501 = vmatpush1.bf16.msra.mxu0 %v462
        %502 = vmatprep.subr.bf16.mxu0 %v461
        %503 = vmatpush1.bf16.msra.mxu0 %v460
        %504 = vmatprep.subr.bf16.mxu0 %v459
        %505 = vmatpush1.bf16.msra.mxu0 %v458
        %506 = vmatprep.subr.bf16.mxu0 0
        %507 = vmatpush2.bf16.msra.mxu0 0
        %508 = vmatprep.subr.bf16.mxu0 0
        %509 = vmatpush2.bf16.msra.mxu0 0
        %510 = vmatprep.subr.bf16.mxu0 0
        %511 = vmatpush2.bf16.msra.mxu0 0
        %512 = vmatprep.subr.bf16.mxu0 0
        %513 = vmatpush2.bf16.msra.mxu0 0
        %514 = vmatprep.subr.bf16.mxu0 0
        %515 = vmatpush2.bf16.msra.mxu0 0
        %516 = vmatprep.subr.bf16.mxu0 0
        %517 = vmatpush2.bf16.msra.mxu0 0
        %518 = vmatprep.subr.bf16.mxu0 0
        %519 = vmatpush2.bf16.msra.mxu0 0
        %520 = vmatprep.subr.bf16.mxu0 0
        %521 = vmatpush2.bf16.msra.mxu0 0
        %522 = vmatprep.mubr.bf16.mxu0 0
        %523 = vmatmul.mubr.bf16.gmra.mxu0 %v402
        %v524 = vpop.f32.mrf.mxu0
        %v525 = vadd.f32 %v379, %v524
        %v526 = vpop.f32.mrf.mxu0
        %v527 = vadd.f32 %v383, %v526
        %v528 = vpop.f32.mrf.mxu0
        %v529 = vadd.f32 %v379, %v528
        %v530 = vpop.f32.mrf.mxu0
        %v531 = vadd.f32 %v383, %v530
        %532 = vmatprep.mubr.bf16.mxu0 0
        %533 = vmatmul.mubr.bf16.gmra.mxu0 %v403
        %v534 = vpop.f32.mrf.mxu0
        %v535 = vadd.f32 %v379, %v534
        %v536 = vpop.f32.mrf.mxu0
        %v537 = vadd.f32 %v383, %v536
        %v538 = vpop.f32.mrf.mxu0
        %v539 = vadd.f32 %v379, %v538
        %v540 = vpop.f32.mrf.mxu0
        %v541 = vadd.f32 %v383, %v540
        %542 = vmatprep.mubr.bf16.mxu0 0
        %543 = vmatmul.mubr.bf16.gmra.mxu0 %v404
        %v544 = vpop.f32.mrf.mxu0
        %v545 = vadd.f32 %v379, %v544
        %v546 = vpop.f32.mrf.mxu0
        %v547 = vadd.f32 %v383, %v546
        %v548 = vpop.f32.mrf.mxu0
        %v549 = vadd.f32 %v379, %v548
        %v550 = vpop.f32.mrf.mxu0
        %v551 = vadd.f32 %v383, %v550
        %552 = vmatprep.mubr.bf16.mxu0 0
        %553 = vmatmul.mubr.bf16.gmra.mxu0 %v405
        %v554 = vpop.f32.mrf.mxu0
        %v555 = vadd.f32 %v379, %v554
        %v556 = vpop.f32.mrf.mxu0
        %v557 = vadd.f32 %v383, %v556
        %v558 = vpop.f32.mrf.mxu0
        %v559 = vadd.f32 %v379, %v558
        %v560 = vpop.f32.mrf.mxu0
        %v561 = vadd.f32 %v383, %v560
        %562 = vdwg.mxu0
        %v563 = vmul.f32 %v525, %v525
        %v564 = vmul.f32 %v527, %v527
        %v565 = vmul.f32 %v529, %v529
        %v566 = vmul.f32 %v531, %v531
        %v567 = vmul.f32 %v535, %v535
        %v568 = vmul.f32 %v537, %v537
        %v569 = vmul.f32 %v539, %v539
        %v570 = vmul.f32 %v541, %v541
        %v571 = vmul.f32 %v545, %v545
        %v572 = vmul.f32 %v547, %v547
        %v573 = vmul.f32 %v549, %v549
        %v574 = vmul.f32 %v551, %v551
        %v575 = vmul.f32 %v555, %v555
        %v576 = vmul.f32 %v557, %v557
        %v577 = vmul.f32 %v559, %v559
        %v578 = vmul.f32 %v561, %v561
        %v579 = vmul.f32 %v525, %v563
        %v580 = vmul.f32 %v527, %v564
        %v581 = vmul.f32 %v529, %v565
        %v582 = vmul.f32 %v531, %v566
        %v583 = vmul.f32 %v535, %v567
        %v584 = vmul.f32 %v537, %v568
        %v585 = vmul.f32 %v539, %v569
        %v586 = vmul.f32 %v541, %v570
        %v587 = vmul.f32 %v545, %v571
        %v588 = vmul.f32 %v547, %v572
        %v589 = vmul.f32 %v549, %v573
        %v590 = vmul.f32 %v551, %v574
        %v591 = vmul.f32 %v555, %v575
        %v592 = vmul.f32 %v557, %v576
        %v593 = vmul.f32 %v559, %v577
        %v594 = vmul.f32 %v561, %v578
        %v595 = vmul.f32 %v579, 0.044715
        %v596 = vmul.f32 %v580, 0.044715
        %v597 = vmul.f32 %v581, 0.044715
        %v598 = vmul.f32 %v582, 0.044715
        %v599 = vmul.f32 %v583, 0.044715
        %v600 = vmul.f32 %v584, 0.044715
        %v601 = vmul.f32 %v585, 0.044715
        %v602 = vmul.f32 %v586, 0.044715
        %v603 = vmul.f32 %v587, 0.044715
        %v604 = vmul.f32 %v588, 0.044715
        %v605 = vmul.f32 %v589, 0.044715
        %v606 = vmul.f32 %v590, 0.044715
        %v607 = vmul.f32 %v591, 0.044715
        %v608 = vmul.f32 %v592, 0.044715
        %v609 = vmul.f32 %v593, 0.044715
        %v610 = vmul.f32 %v594, 0.044715
        %v611 = vadd.f32 %v525, %v595
        %v612 = vadd.f32 %v527, %v596
        %v613 = vadd.f32 %v529, %v597
        %v614 = vadd.f32 %v531, %v598
        %v615 = vadd.f32 %v535, %v599
        %v616 = vadd.f32 %v537, %v600
        %v617 = vadd.f32 %v539, %v601
        %v618 = vadd.f32 %v541, %v602
        %v619 = vadd.f32 %v545, %v603
        %v620 = vadd.f32 %v547, %v604
        %v621 = vadd.f32 %v549, %v605
        %v622 = vadd.f32 %v551, %v606
        %v623 = vadd.f32 %v555, %v607
        %v624 = vadd.f32 %v557, %v608
        %v625 = vadd.f32 %v559, %v609
        %v626 = vadd.f32 %v561, %v610
        %v627 = vmul.f32 %v611, 0.7978846
        %v628 = vmul.f32 %v612, 0.7978846
        %v629 = vmul.f32 %v613, 0.7978846
        %v630 = vmul.f32 %v614, 0.7978846
        %v631 = vmul.f32 %v615, 0.7978846
        %v632 = vmul.f32 %v616, 0.7978846
        %v633 = vmul.f32 %v617, 0.7978846
        %v634 = vmul.f32 %v618, 0.7978846
        %v635 = vmul.f32 %v619, 0.7978846
        %v636 = vmul.f32 %v620, 0.7978846
        %v637 = vmul.f32 %v621, 0.7978846
        %v638 = vmul.f32 %v622, 0.7978846
        %v639 = vmul.f32 %v623, 0.7978846
        %v640 = vmul.f32 %v624, 0.7978846
        %v641 = vmul.f32 %v625, 0.7978846
        %v642 = vmul.f32 %v626, 0.7978846
        %v643 = vtanh.pop %v627
        %v644 = vtanh.pop %v628
        %v645 = vtanh.pop %v629
        %v646 = vtanh.pop %v630
        %v647 = vtanh.pop %v631
        %v648 = vtanh.pop %v632
        %v649 = vtanh.pop %v633
        %v650 = vtanh.pop %v634
        %v651 = vtanh.pop %v635
        %v652 = vtanh.pop %v636
        %v653 = vtanh.pop %v637
        %v654 = vtanh.pop %v638
        %v655 = vtanh.pop %v639
        %v656 = vtanh.pop %v640
        %v657 = vtanh.pop %v641
        %v658 = vtanh.pop %v642
        %v659 = vadd.f32 %v643, 1.0
        %v660 = vadd.f32 %v644, 1.0
        %v661 = vadd.f32 %v645, 1.0
        %v662 = vadd.f32 %v646, 1.0
        %v663 = vadd.f32 %v647, 1.0
        %v664 = vadd.f32 %v648, 1.0
        %v665 = vadd.f32 %v649, 1.0
        %v666 = vadd.f32 %v650, 1.0
        %v667 = vadd.f32 %v651, 1.0
        %v668 = vadd.f32 %v652, 1.0
        %v669 = vadd.f32 %v653, 1.0
        %v670 = vadd.f32 %v654, 1.0
        %v671 = vadd.f32 %v655, 1.0
        %v672 = vadd.f32 %v656, 1.0
        %v673 = vadd.f32 %v657, 1.0
        %v674 = vadd.f32 %v658, 1.0
        %v675 = vmul.f32 %v659, 0.5
        %v676 = vmul.f32 %v660, 0.5
        %v677 = vmul.f32 %v661, 0.5
        %v678 = vmul.f32 %v662, 0.5
        %v679 = vmul.f32 %v663, 0.5
        %v680 = vmul.f32 %v664, 0.5
        %v681 = vmul.f32 %v665, 0.5
        %v682 = vmul.f32 %v666, 0.5
        %v683 = vmul.f32 %v667, 0.5
        %v684 = vmul.f32 %v668, 0.5
        %v685 = vmul.f32 %v669, 0.5
        %v686 = vmul.f32 %v670, 0.5
        %v687 = vmul.f32 %v671, 0.5
        %v688 = vmul.f32 %v672, 0.5
        %v689 = vmul.f32 %v673, 0.5
        %v690 = vmul.f32 %v674, 0.5
        %v691 = vmul.f32 %v525, %v675
        %v692 = vmul.f32 %v527, %v676
        %v693 = vmul.f32 %v529, %v677
        %v694 = vmul.f32 %v531, %v678
        %v695 = vmul.f32 %v535, %v679
        %v696 = vmul.f32 %v537, %v680
        %v697 = vmul.f32 %v539, %v681
        %v698 = vmul.f32 %v541, %v682
        %v699 = vmul.f32 %v545, %v683
        %v700 = vmul.f32 %v547, %v684
        %v701 = vmul.f32 %v549, %v685
        %v702 = vmul.f32 %v551, %v686
        %v703 = vmul.f32 %v555, %v687
        %v704 = vmul.f32 %v557, %v688
        %v705 = vmul.f32 %v559, %v689
        %v706 = vmul.f32 %v561, %v690
        %v707 = vld [vmem:[#allocation2] sm:$0xff]
        %v708 = vld [vmem:[#allocation2 + $0x8] sm:$0xff]
        %v709 = vld [vmem:[#allocation2 + $0x10] sm:$0xff]
        %v710 = vld [vmem:[#allocation2 + $0x18] sm:$0xff]
        %v711 = vld [vmem:[#allocation2 + $0x20] sm:$0xff]
        %v712 = vld [vmem:[#allocation2 + $0x28] sm:$0xff]
        %v713 = vld [vmem:[#allocation2 + $0x30] sm:$0xff]
        %v714 = vld [vmem:[#allocation2 + $0x38] sm:$0xff]
        %v715 = vpack.c.bf16 %v693, %v691
        %v716 = vpack.c.bf16 %v694, %v692
        %v717 = vpack.c.bf16 %v697, %v695
        %v718 = vpack.c.bf16 %v698, %v696
        %v719 = vpack.c.bf16 %v701, %v699
        %v720 = vpack.c.bf16 %v702, %v700
        %v721 = vpack.c.bf16 %v705, %v703
        %v722 = vpack.c.bf16 %v706, %v704
        %v723 = vld [vmem:[%s328] sm:$0xf]
        %v724 = vld [vmem:[%s328 + $0x4] sm:$0xf]
        %v725 = vld [vmem:[%s328 + $0x8] sm:$0xf]
        %v726 = vld [vmem:[%s328 + $0xc] sm:$0xf]
        %v727 = vld [vmem:[%s328 + $0x10] sm:$0xf]
        %v728 = vld [vmem:[%s328 + $0x14] sm:$0xf]
        %v729 = vld [vmem:[%s328 + $0x18] sm:$0xf]
        %v730 = vld [vmem:[%s328 + $0x1c] sm:$0xf]
        %v731 = vld [vmem:[%s328 + $0x20] sm:$0xf]
        %v732 = vld [vmem:[%s328 + $0x24] sm:$0xf]
        %v733 = vld [vmem:[%s328 + $0x28] sm:$0xf]
        %v734 = vld [vmem:[%s328 + $0x2c] sm:$0xf]
        %v735 = vld [vmem:[%s328 + $0x30] sm:$0xf]
        %v736 = vld [vmem:[%s328 + $0x34] sm:$0xf]
        %v737 = vld [vmem:[%s328 + $0x38] sm:$0xf]
        %v738 = vld [vmem:[%s328 + $0x3c] sm:$0xf]
        %v739 = vld [vmem:[%s328 + $0x40] sm:$0xf]
        %v740 = vld [vmem:[%s328 + $0x44] sm:$0xf]
        %v741 = vld [vmem:[%s328 + $0x48] sm:$0xf]
        %v742 = vld [vmem:[%s328 + $0x4c] sm:$0xf]
        %v743 = vld [vmem:[%s328 + $0x50] sm:$0xf]
        %v744 = vld [vmem:[%s328 + $0x54] sm:$0xf]
        %v745 = vld [vmem:[%s328 + $0x58] sm:$0xf]
        %v746 = vld [vmem:[%s328 + $0x5c] sm:$0xf]
        %v747 = vld [vmem:[%s328 + $0x60] sm:$0xf]
        %v748 = vld [vmem:[%s328 + $0x64] sm:$0xf]
        %v749 = vld [vmem:[%s328 + $0x68] sm:$0xf]
        %v750 = vld [vmem:[%s328 + $0x6c] sm:$0xf]
        %v751 = vld [vmem:[%s328 + $0x70] sm:$0xf]
        %v752 = vld [vmem:[%s328 + $0x74] sm:$0xf]
        %v753 = vld [vmem:[%s328 + $0x78] sm:$0xf]
        %v754 = vld [vmem:[%s328 + $0x7c] sm:$0xf]
        %v787 = vunpack.c.l.b16 %v723
        %v788 = vunpack.c.l.b16 %v724
        %v789 = vunpack.c.l.b16 %v725
        %v790 = vunpack.c.l.b16 %v726
        %v791 = vunpack.c.l.b16 %v727
        %v792 = vunpack.c.l.b16 %v728
        %v793 = vunpack.c.l.b16 %v729
        %v794 = vunpack.c.l.b16 %v730
        %v795 = vunpack.c.l.b16 %v731
        %v796 = vunpack.c.l.b16 %v732
        %v797 = vunpack.c.l.b16 %v733
        %v798 = vunpack.c.l.b16 %v734
        %v799 = vunpack.c.l.b16 %v735
        %v800 = vunpack.c.l.b16 %v736
        %v801 = vunpack.c.l.b16 %v737
        %v802 = vunpack.c.l.b16 %v738
        %v803 = vunpack.c.l.b16 %v739
        %v804 = vunpack.c.l.b16 %v740
        %v805 = vunpack.c.l.b16 %v741
        %v806 = vunpack.c.l.b16 %v742
        %v807 = vunpack.c.l.b16 %v743
        %v808 = vunpack.c.l.b16 %v744
        %v809 = vunpack.c.l.b16 %v745
        %v810 = vunpack.c.l.b16 %v746
        %v811 = vunpack.c.l.b16 %v747
        %v812 = vunpack.c.l.b16 %v748
        %v813 = vunpack.c.l.b16 %v749
        %v814 = vunpack.c.l.b16 %v750
        %v815 = vunpack.c.l.b16 %v751
        %v816 = vunpack.c.l.b16 %v752
        %v817 = vunpack.c.l.b16 %v753
        %v818 = vunpack.c.l.b16 %v754
        %v819 = vpack.c.b16 %v788, %v787
        %v820 = vpack.c.b16 %v790, %v789
        %v821 = vpack.c.b16 %v792, %v791
        %v822 = vpack.c.b16 %v794, %v793
        %v823 = vpack.c.b16 %v796, %v795
        %v824 = vpack.c.b16 %v798, %v797
        %v825 = vpack.c.b16 %v800, %v799
        %v826 = vpack.c.b16 %v802, %v801
        %v827 = vpack.c.b16 %v804, %v803
        %v828 = vpack.c.b16 %v806, %v805
        %v829 = vpack.c.b16 %v808, %v807
        %v830 = vpack.c.b16 %v810, %v809
        %v831 = vpack.c.b16 %v812, %v811
        %v832 = vpack.c.b16 %v814, %v813
        %v833 = vpack.c.b16 %v816, %v815
        %v834 = vpack.c.b16 %v818, %v817
        %851 = vmatprep.subr.bf16.mxu0 0
        %852 = vmatpush1.bf16.msra.mxu0 %v826
        %853 = vmatprep.subr.bf16.mxu0 0
        %854 = vmatpush1.bf16.msra.mxu0 %v825
        %855 = vmatprep.subr.bf16.mxu0 0
        %856 = vmatpush1.bf16.msra.mxu0 %v824
        %857 = vmatprep.subr.bf16.mxu0 0
        %858 = vmatpush1.bf16.msra.mxu0 %v823
        %859 = vmatprep.subr.bf16.mxu0 0
        %860 = vmatpush1.bf16.msra.mxu0 %v822
        %861 = vmatprep.subr.bf16.mxu0 0
        %862 = vmatpush1.bf16.msra.mxu0 %v821
        %863 = vmatprep.subr.bf16.mxu0 0
        %864 = vmatpush1.bf16.msra.mxu0 %v820
        %865 = vmatprep.subr.bf16.mxu0 0
        %866 = vmatpush1.bf16.msra.mxu0 %v819
        %867 = vmatprep.subr.bf16.mxu0 0
        %868 = vmatpush2.bf16.msra.mxu0 %v834
        %869 = vmatprep.subr.bf16.mxu0 0
        %870 = vmatpush2.bf16.msra.mxu0 %v833
        %871 = vmatprep.subr.bf16.mxu0 0
        %872 = vmatpush2.bf16.msra.mxu0 %v832
        %873 = vmatprep.subr.bf16.mxu0 0
        %874 = vmatpush2.bf16.msra.mxu0 %v831
        %875 = vmatprep.subr.bf16.mxu0 0
        %876 = vmatpush2.bf16.msra.mxu0 %v830
        %877 = vmatprep.subr.bf16.mxu0 0
        %878 = vmatpush2.bf16.msra.mxu0 %v829
        %879 = vmatprep.subr.bf16.mxu0 0
        %880 = vmatpush2.bf16.msra.mxu0 %v828
        %881 = vmatprep.subr.bf16.mxu0 0
        %882 = vmatpush2.bf16.msra.mxu0 %v827
        %883 = vmatprep.mubr.bf16.mxu0 %v716
        %884 = vmatmul.mubr.bf16.gmra.mxu0 %v715
        %v885 = vpop.f32.mrf.mxu0
        %v886 = vadd.f32 0.0, %v885
        %v887 = vpop.f32.mrf.mxu0
        %v888 = vpop.f32.mrf.mxu0
        %v889 = vadd.f32 0.0, %v888
        %v890 = vpop.f32.mrf.mxu0
        %891 = vmatprep.mubr.bf16.mxu0 %v718
        %892 = vmatmul.mubr.bf16.gmra.mxu0 %v717
        %v893 = vpop.f32.mrf.mxu0
        %v894 = vadd.f32 0.0, %v893
        %v895 = vpop.f32.mrf.mxu0
        %v896 = vpop.f32.mrf.mxu0
        %v897 = vadd.f32 0.0, %v896
        %v898 = vpop.f32.mrf.mxu0
        %899 = vmatprep.mubr.bf16.mxu0 %v720
        %900 = vmatmul.mubr.bf16.gmra.mxu0 %v719
        %v901 = vpop.f32.mrf.mxu0
        %v902 = vadd.f32 0.0, %v901
        %v903 = vpop.f32.mrf.mxu0
        %v904 = vpop.f32.mrf.mxu0
        %v905 = vadd.f32 0.0, %v904
        %v906 = vpop.f32.mrf.mxu0
        %907 = vmatprep.mubr.bf16.mxu0 %v722
        %908 = vmatmul.mubr.bf16.gmra.mxu0 %v721
        %v909 = vpop.f32.mrf.mxu0
        %v910 = vadd.f32 0.0, %v909
        %v911 = vpop.f32.mrf.mxu0
        %v912 = vpop.f32.mrf.mxu0
        %v913 = vadd.f32 0.0, %v912
        %v914 = vpop.f32.mrf.mxu0
        %915 = vdwg.mxu0
        %v916 = vadd.f32 %v707, %v886
        %v917 = vadd.f32 %v708, %v889
        %v918 = vadd.f32 %v709, %v894
        %v919 = vadd.f32 %v710, %v897
        %v920 = vadd.f32 %v711, %v902
        %v921 = vadd.f32 %v712, %v905
        %v922 = vadd.f32 %v713, %v910
        %v923 = vadd.f32 %v714, %v913
        %vm924 = vcmask 64512
        %925 = vst.msk [vmem:[#allocation2] sm:$0xff] %vm924, %v916
        %926 = vst.msk [vmem:[#allocation2 + $0x8] sm:$0xff] %vm924, %v917
        %927 = vst.msk [vmem:[#allocation2 + $0x10] sm:$0xff] %vm924, %v918
        %928 = vst.msk [vmem:[#allocation2 + $0x18] sm:$0xff] %vm924, %v919
        %929 = vst.msk [vmem:[#allocation2 + $0x20] sm:$0xff] %vm924, %v920
        %930 = vst.msk [vmem:[#allocation2 + $0x28] sm:$0xff] %vm924, %v921
        %931 = vst.msk [vmem:[#allocation2 + $0x30] sm:$0xff] %vm924, %v922
        %932 = vst.msk [vmem:[#allocation2 + $0x38] sm:$0xff] %vm924, %v923
        // Predicated region
        $region53: #{tpu_custom_call.1} parent=39 // pred_check
          %p933 = pneg %p332
        $region54: #{tpu_custom_call.1} parent=39 // pred_check_branch
          %935 = sbr.rel (%p933) target = $region56
        $region55: #{tpu_custom_call.1} parent=39 // pred_region
          %v936 = vld [vmem:[#allocation2] sm:$0xff]
          %v937 = vld [vmem:[#allocation2 + $0x8] sm:$0xff]
          %v938 = vld [vmem:[#allocation2 + $0x10] sm:$0xff]
          %v939 = vld [vmem:[#allocation2 + $0x18] sm:$0xff]
          %v940 = vld [vmem:[#allocation2 + $0x20] sm:$0xff]
          %v941 = vld [vmem:[#allocation2 + $0x28] sm:$0xff]
          %v942 = vld [vmem:[#allocation2 + $0x30] sm:$0xff]
          %v943 = vld [vmem:[#allocation2 + $0x38] sm:$0xff]
          %v944 = vld [vmem:[%s4] sm:$0x1]
          %v946 = vlaneseq
          %v947 = vshrl.u32 %v946, 7
          %v948 = vsub.s32 0, %v947
          %v949 = vrot.slane %v944, %v948
          %v951 = vadd.f32 %v936, %v949
          %v952 = vadd.f32 %v937, %v949
          %v953 = vadd.f32 %v938, %v949
          %v954 = vadd.f32 %v939, %v949
          %v955 = vadd.f32 %v940, %v949
          %v956 = vadd.f32 %v941, %v949
          %v957 = vadd.f32 %v942, %v949
          %v958 = vadd.f32 %v943, %v949
          %v959 = vpack.c.bf16 %v952, %v951
          %v960 = vpack.c.bf16 %v954, %v953
          %v961 = vpack.c.bf16 %v956, %v955
          %v962 = vpack.c.bf16 %v958, %v957
          %v963 = vld [vmem:[#allocation3] sm:$0xff]
          %964 = vxpose.xlu0.c.b16.start [1/8] %v959, 128
          %965 = vxpose.xlu0.c.b16.cont [2/8] %v960, 128
          %966 = vxpose.xlu0.c.b16.cont [3/8] %v961, 128
          %967 = vxpose.xlu0.c.b16.cont [4/8] %v962, 128
          %968 = vxpose.xlu0.c.b16.cont [5/8] 0, 128
          %969 = vxpose.xlu0.c.b16.cont [6/8] 0, 128
          %970 = vxpose.xlu0.c.b16.cont [7/8] 0, 128
          %971 = vxpose.xlu0.c.b16.end [8/8] 0, 128
          %v972 = vpop.trf.xlu0
          %v973 = vpop.trf.xlu0
          %v974 = vpop.trf.xlu0
          %v975 = vpop.trf.xlu0
          %v976 = vpop.trf.xlu0
          %v977 = vpop.trf.xlu0
          %v978 = vpop.trf.xlu0
          %v979 = vpop.trf.xlu0
          %vm980 = vcmask 523264
          %v982 = vsel %vm980, %v972, 0
          %984 = vmatprep.subr.bf16.mxu0 0
          %985 = vmatpush1.bf16.msra.mxu0 0
          %986 = vmatprep.subr.bf16.mxu0 0
          %987 = vmatpush1.bf16.msra.mxu0 0
          %988 = vmatprep.subr.bf16.mxu0 0
          %989 = vmatpush1.bf16.msra.mxu0 0
          %990 = vmatprep.subr.bf16.mxu0 0
          %991 = vmatpush1.bf16.msra.mxu0 0
          %992 = vmatprep.subr.bf16.mxu0 0
          %993 = vmatpush1.bf16.msra.mxu0 %v405
          %994 = vmatprep.subr.bf16.mxu0 0
          %995 = vmatpush1.bf16.msra.mxu0 %v404
          %996 = vmatprep.subr.bf16.mxu0 0
          %997 = vmatpush1.bf16.msra.mxu0 %v403
          %998 = vmatprep.subr.bf16.mxu0 0
          %999 = vmatpush1.bf16.msra.mxu0 %v402
          %1000 = vmatprep.subr.bf16.mxu0 0
          %1001 = vmatpush2.bf16.msra.mxu0 0
          %1002 = vmatprep.subr.bf16.mxu0 0
          %1003 = vmatpush2.bf16.msra.mxu0 0
          %1004 = vmatprep.subr.bf16.mxu0 0
          %1005 = vmatpush2.bf16.msra.mxu0 0
          %1006 = vmatprep.subr.bf16.mxu0 0
          %1007 = vmatpush2.bf16.msra.mxu0 0
          %1008 = vmatprep.subr.bf16.mxu0 0
          %1009 = vmatpush2.bf16.msra.mxu0 0
          %1010 = vmatprep.subr.bf16.mxu0 0
          %1011 = vmatpush2.bf16.msra.mxu0 0
          %1012 = vmatprep.subr.bf16.mxu0 0
          %1013 = vmatpush2.bf16.msra.mxu0 0
          %1014 = vmatprep.subr.bf16.mxu0 0
          %1015 = vmatpush2.bf16.msra.mxu0 0
          %1016 = vmatprep.mubr.bf16.mxu0 0
          %1017 = vmatmul.mubr.bf16.gmra.mxu0 %v982
          %v1018 = vpop.f32.mrf.mxu0
          %v1019 = vadd.f32 0.0, %v1018
          %v1020 = vpop.f32.mrf.mxu0
          %v1021 = vpop.f32.mrf.mxu0
          %v1022 = vpop.f32.mrf.mxu0
          %1023 = vdwg.mxu0
          %v1024 = vadd.f32 %v963, %v1019
          %1025 = vst [vmem:[#allocation3] sm:$0xff] %v1024
        $region56: #{tpu_custom_call.1} parent=39 // pred_fallthru
          _
        // Predicated region
        $region57: #{tpu_custom_call.1} parent=39 // pred_check
          _
        $region58: #{tpu_custom_call.1} parent=39 // pred_check_branch
          %1027 = sbr.rel (%p333) target = $region60
        $region59: #{tpu_custom_call.1} parent=39 // pred_region
          %v1028 = vld [vmem:[#allocation3] sm:$0xff]
          %v1029 = vmul.f32 %v1028, 0.015625
          %1030 = vst [vmem:[%s310] sm:$0xff] %v1029
        $region60: #{tpu_custom_call.1} parent=39 // pred_fallthru
          _
        %s1031 = sand.u32 %s176, 1
        %s1032 = scalar_lea.sflag [#allocation6], %s1031
        %s1033 = sand.u32 %s176, 1
        %s1034 = smul.addr %s1033, 8
        %s1035 = scalar_lea.vmem [#allocation7], %s1034
        // Predicated region
        $region61: #{tpu_custom_call.1} parent=39 // pred_check
          %p1036 = pneg %p186
        $region62: #{tpu_custom_call.1} parent=39 // pred_check_branch
          %1038 = sbr.rel (%p1036) target = $region64
        $region63: #{tpu_custom_call.1} parent=39 // pred_region
          %s1040 = ssub.s32 128, 128
          %1041 = vsyncadd %s1032, %s1040
          %s1042 = smul.addr %s27, 128
          %s1043 = scalar_lea.hbm %s5, %s1042
          %s1045 = sshll.u32 %s1035, 4
          %s1046 = int_to_ptr.vmem [resolvable:$true] %s1045
          %1048 = dma.vmem_to_hbm [thread:$0]  %s1046, 128, %s1043, %s1032
        $region64: #{tpu_custom_call.1} parent=39 // pred_fallthru
          _
      $region40: #{tpu_custom_call.1} parent=5 // pred_fallthru
        _
      %p1049 = scmp.le.s32.totalorder 2, %s17
      // Predicated region
      $region65: #{tpu_custom_call.1} parent=5 // pred_check
        %p1050 = pneg %p1049
      $region66: #{tpu_custom_call.1} parent=5 // pred_check_branch
        %1052 = sbr.rel (%p1050) target = $region68
      $region67: #{tpu_custom_call.1} parent=5 // pred_region
        %s1053 = ssub.s32 %s17, 2
        // Predicated region
        $region69: #{tpu_custom_call.1} parent=67 // pred_check
          %p1054 = pneg %p192
        $region70: #{tpu_custom_call.1} parent=67 // pred_check_branch
          %1056 = sbr.rel (%p1054) target = $region72
        $region71: #{tpu_custom_call.1} parent=67 // pred_region
          %s1057 = sand.u32 %s177, 1
          %s1058 = scalar_lea.sflag [#allocation6], %s1057
          %s1059 = sand.u32 %s177, 1
          %s1060 = smul.addr %s1059, 8
          %s1061 = scalar_lea.vmem [#allocation7], %s1060
          %1062 = dma.done %s1058, 128
        $region72: #{tpu_custom_call.1} parent=67 // pred_fallthru
          _
      $region68: #{tpu_custom_call.1} parent=5 // pred_fallthru
        _
    $region6: #{tpu_custom_call.1} parent=1 // loop_footer
      %s21 = sadd.s32 1, %s17
    $region7: #{tpu_custom_call.1} parent=1 // loop_footer_branch
      %16 = sbr.rel target = $region3
    $region8: #{tpu_custom_call.1} parent=1 // loop_exit
      _
    %1063 = vsyncpa [#allocation5], 1
    %s1064 = scalar_lea.sflag [#allocation5], 1
    %1065 = vsyncpa %s1064, 1
    %1066 = vsyncpa [#allocation6], 1
    %s1067 = scalar_lea.sflag [#allocation6], 1
    %1068 = vsyncpa %s1067, 1

</llo_original>
